<compile_context>
chip_gen: v5e
topology: v5e:2x2
jax: 0.10.0
libtpu: 0.0.40
codegen_flags: <defaults>
</compile_context>

<pallas_src>
import functools
import math

import numpy as np
import jax
import jax.numpy as jnp
from jax.experimental import pallas as pl
from jax.experimental.pallas import tpu as pltpu


# ----------------------------- kernels --------------------------------------

def _stft_resident_kernel(frames_ref, basis_ref, out_ref):
    # frames: (tm, n_fft), basis: (n_fft, Fp) resident, out: (tm, Fp)
    out_ref[...] = jnp.dot(frames_ref[...], basis_ref[...],
                           preferred_element_type=jnp.float32)


def _stft_tiled_kernel(frames_ref, basis_ref, out_ref, acc_ref):
    # grid = (freq, rows, K); K is the reduction axis (innermost).
    @pl.when(pl.program_id(2) == 0)
    def _():
        acc_ref[...] = jnp.zeros_like(acc_ref)

    acc_ref[...] += jnp.dot(frames_ref[...], basis_ref[...],
                            preferred_element_type=jnp.float32)

    @pl.when(pl.program_id(2) == pl.num_programs(2) - 1)
    def _():
        out_ref[...] = acc_ref[...]


# ----------------------------- helpers --------------------------------------

def _round_up(a, m):
    return ((a + m - 1) // m) * m


def _round_down(a, m):
    return (a // m) * m


def hann_window(n_fft):
    # torch.hann_window(n_fft), default periodic=True
    n = jnp.arange(n_fft, dtype=jnp.float32)
    return 0.5 - 0.5 * jnp.cos(2.0 * math.pi * n / n_fft)


def make_stft_basis(n_fft, window=None):
    """Windowed real-DFT basis, (n_fft, Fp) f32, Fp = round_up(n_fft, 128).

    Columns [0, N) are cos_k; columns [N, n_fft) are -sin_k with the
    identically-zero sine columns (k=0 and, for even n_fft, k=n_fft/2)
    dropped, so the useful column count is exactly n_fft. The Hann window is
    folded into the basis. Angles use modular reduction of n*k in float64 so
    large n_fft keeps full f32 accuracy.
    """
    if window is None:
        window = hann_window(n_fft)
    N = n_fft // 2 + 1
    Fp = _round_up(n_fft, 128)
    n = np.arange(n_fft, dtype=np.int64)[:, None]
    k = np.arange(N, dtype=np.int64)[None, :]
    ang = (2.0 * np.pi / n_fft) * np.mod(n * k, n_fft).astype(np.float64)
    cos_b = np.cos(ang)
    msin_b = -np.sin(ang)
    keep = np.ones(N, dtype=bool)
    keep[0] = False
    if n_fft % 2 == 0:
        keep[N - 1] = False
    basis = np.concatenate([cos_b, msin_b[:, keep]], axis=1).astype(np.float32)
    assert basis.shape[1] == n_fft
    basis = jnp.asarray(basis) * window.astype(jnp.float32)[:, None]
    return jnp.pad(basis, ((0, 0), (0, Fp - n_fft)))


def _vmem_capacity_bytes():
    try:
        return int(pltpu.get_tpu_info().vmem_capacity_bytes)
    except Exception:
        return 64 * 2 ** 20          # conservative (v7x-sized) fallback


def _plan(M, n_fft, Fp, budget, tm_req, tn_req, tk_req):
    """Pick a path + tile sizes so the (double-buffered) f32 tiles fit budget."""
    M8 = _round_up(max(M, 1), 8)
    basis_bytes = 4 * n_fft * Fp

    want_resident = (tn_req is None or tn_req >= Fp) and \
                    (tk_req is None or tk_req >= n_fft)
    tm_min = min(128, M8)
    row_bytes = 2 * 4 * (n_fft + Fp)   # double-buffered frames + out, per row

    if want_resident and 2 * basis_bytes + tm_min * row_bytes <= budget:
        tm_cap = (budget - 2 * basis_bytes) // row_bytes
        if tm_req is not None:
            tm_cap = min(tm_cap, _round_up(tm_req, 8))
        tm_cap = min(tm_cap, 2048)
        if M8 <= tm_cap:
            tm = M8                                   # single row tile
        else:
            tm = _round_down(tm_cap, 128) if tm_cap >= 128 else _round_down(tm_cap, 8)
        tm = max(8, tm)
        vmem_bytes = 2 * basis_bytes + tm * row_bytes
        return dict(path="resident", tm=tm, tn=Fp, tk=n_fft,
                    vmem_bytes=vmem_bytes)

    # Tiled fallback (large n_fft / explicit tile overrides): K reduction axis.
    tn = Fp if tn_req is None else max(128, min(Fp, _round_up(tn_req, 128)))
    if n_fft >= 128:
        tk = n_fft if tk_req is None else max(128, min(n_fft, _round_up(tk_req, 128)))
    else:
        tk = n_fft                                    # full-extent K (tiny n_fft)
    tm = 256 if tm_req is None else max(8, _round_up(tm_req, 8))
    tm = min(tm, M8)

    def need(tm_, tn_, tk_):
        # 2x frames tile + 2x basis tile + 2x out tile + accumulator (f32)
        return 4 * (2 * tm_ * tk_ + 2 * tk_ * tn_ + 2 * tm_ * tn_ + tm_ * tn_)

    while need(tm, tn, tk) > budget:
        if tk > 128 and tk >= tn:
            tk = max(128, _round_down(tk // 2, 128))
        elif tn > 128:
            tn = max(128, _round_down(tn // 2, 128))
        elif tm > 8:
            tm = max(8, _round_down(tm // 2, 8))
        else:
            break
    return dict(path="tiled", tm=tm, tn=tn, tk=tk, vmem_bytes=need(tm, tn, tk))


# ----------------------------- wrapper ---------------------------------------

def stft_pallas(x, basis, *, n_fft, hop_length, tm=None, tn=None, tk=None,
                vmem_budget_bytes=None):
    """x: (B, L) f32, basis: (n_fft, Fp) windowed DFT basis (make_stft_basis).

    Returns (B, N, T, 2) f32 with N = n_fft//2 + 1 and T = 1 + L // hop_length,
    matching torch.stft(center=True, onesided=True, return_complex=False).
    """
    B, L = x.shape
    N = n_fft // 2 + 1
    pad = n_fft // 2
    Fp = basis.shape[1]

    # --- glue: center/reflect pad + frame extraction (im2col) ---
    # TODO(synk): stream the padded signal and unfold frames inside the kernel
    # (manual per-tile slab DMA, block-Toeplitz accumulation) to remove the
    # ~n_fft/hop HBM inflation of this materialized im2col; with the resident
    # basis it is now the dominant HBM traffic.
    xp = jnp.pad(x, ((0, 0), (pad, pad)), mode="reflect")
    T = 1 + L // hop_length
    idx = (jnp.arange(T) * hop_length)[:, None] + jnp.arange(n_fft)[None, :]
    frames = xp[:, idx].reshape(B * T, n_fft)              # (M, n_fft)
    M = B * T

    # --- generation-aware VMEM budgeting ---
    cap = _vmem_capacity_bytes()
    if vmem_budget_bytes is None:
        budget = max(32 * 2 ** 20, min(cap - 20 * 2 ** 20, 112 * 2 ** 20))
    else:
        budget = max(8 * 2 ** 20, min(int(vmem_budget_bytes), cap - 8 * 2 ** 20))

    plan = _plan(M, n_fft, Fp, budget, tm, tn, tk)
    tm_, tn_, tk_ = plan["tm"], plan["tn"], plan["tk"]
    vmem_limit = int(min(cap - 8 * 2 ** 20,
                         max(plan["vmem_bytes"] + 8 * 2 ** 20, 32 * 2 ** 20)))

    M_pad = _round_up(M, tm_)
    gm = M_pad // tm_

    if plan["path"] == "resident":
        frames_p = jnp.pad(frames, ((0, M_pad - M), (0, 0)))
        flops = 2 * M_pad * n_fft * Fp
        bytes_accessed = 4 * (M_pad * n_fft + n_fft * Fp + M_pad * Fp)
        out = pl.pallas_call(
            _stft_resident_kernel,
            out_shape=jax.ShapeDtypeStruct((M_pad, Fp), jnp.float32),
            grid=(gm,),
            in_specs=[
                pl.BlockSpec((tm_, n_fft), lambda i: (i, 0)),     # frame tile
                pl.BlockSpec((n_fft, Fp), lambda i: (0, 0)),      # resident basis
            ],
            out_specs=pl.BlockSpec((tm_, Fp), lambda i: (i, 0)),
            compiler_params=pltpu.CompilerParams(
                dimension_semantics=("parallel",),
                vmem_limit_bytes=vmem_limit),
            cost_estimate=pl.CostEstimate(flops=flops, transcendentals=0,
                                          bytes_accessed=bytes_accessed),
        )(frames_p, basis)
    else:
        gn = -(-Fp // tn_)
        gk = -(-n_fft // tk_)
        Kp = gk * tk_
        Fp2 = gn * tn_
        frames_p = jnp.pad(frames, ((0, M_pad - M), (0, Kp - n_fft)))
        basis_p = jnp.pad(basis, ((0, Kp - n_fft), (0, Fp2 - Fp)))
        flops = 2 * M_pad * Kp * Fp2
        bytes_accessed = 4 * (gn * M_pad * Kp + gm * Kp * Fp2 + M_pad * Fp2)
        out = pl.pallas_call(
            _stft_tiled_kernel,
            out_shape=jax.ShapeDtypeStruct((M_pad, Fp2), jnp.float32),
            # freq axis outermost so its basis column-slab stays hot while the
            # (many) frame tiles stream; K (reduction) innermost.
            grid=(gn, gm, gk),
            in_specs=[
                pl.BlockSpec((tm_, tk_), lambda j, i, k: (i, k)),
                pl.BlockSpec((tk_, tn_), lambda j, i, k: (k, j)),
            ],
            out_specs=pl.BlockSpec((tm_, tn_), lambda j, i, k: (i, j)),
            scratch_shapes=[pltpu.VMEM((tm_, tn_), jnp.float32)],
            compiler_params=pltpu.CompilerParams(
                dimension_semantics=("parallel", "parallel", "arbitrary"),
                vmem_limit_bytes=vmem_limit),
            cost_estimate=pl.CostEstimate(flops=flops, transcendentals=0,
                                          bytes_accessed=bytes_accessed),
        )(frames_p, basis_p)

    # --- epilogue: re-insert zero imaginary bins, lay out as (B, N, T, 2) ---
    out = out[:M, :n_fft]
    real = out[:, :N]
    zero = jnp.zeros((M, 1), out.dtype)
    if n_fft % 2 == 0:
        imag = jnp.concatenate([zero, out[:, N:], zero], axis=1)
    else:
        imag = jnp.concatenate([zero, out[:, N:]], axis=1)
    spec = jnp.stack([real, imag], axis=-1).reshape(B, T, N, 2)
    return jnp.transpose(spec, (0, 2, 1, 3))                # (B, N, T, 2)


class STFT:
    """JAX/Pallas port of the PyTorch STFT module's forward pass."""

    def __init__(self, n_fft, hop_length):
        self.n_fft = n_fft
        self.hop_length = hop_length
        self.window = hann_window(n_fft)            # == torch.hann_window(n_fft)
        self.basis = make_stft_basis(n_fft, self.window)   # built once, cached
        self._forward = jax.jit(functools.partial(
            stft_pallas, n_fft=n_fft, hop_length=hop_length))

    def __call__(self, input_signal):
        return self._forward(input_signal, self.basis)


# ----------------------------- tests -----------------------------------------

if __name__ == "__main__":
    def jax_reference(x, n_fft, hop, window):
        B, L = x.shape
        pad = n_fft // 2
        xp = jnp.pad(x, ((0, 0), (pad, pad)), mode="reflect")
        T = 1 + L // hop
        N = n_fft // 2 + 1
        idx = (jnp.arange(T) * hop)[:, None] + jnp.arange(n_fft)[None, :]
        frames = xp[:, idx] * window[None, None, :]          # (B, T, n_fft)
        n = np.arange(n_fft, dtype=np.float64)[:, None]
        k = np.arange(N, dtype=np.float64)[None, :]
        ang = 2.0 * np.pi * n * k / n_fft
        cosb = jnp.asarray(np.cos(ang).astype(np.float32))
        sinb = jnp.asarray(np.sin(ang).astype(np.float32))
        real = jnp.einsum("btn,nk->bkt", frames, cosb)
        imag = jnp.einsum("btn,nk->bkt", frames, -sinb)
        return jnp.stack([real, imag], axis=-1)              # (B, N, T, 2)

    key = jax.random.PRNGKey(0)

    # 1) small smoke test (resident-basis path, lane padding 16 -> 128)
    B, L, n_fft, hop = 2, 64, 16, 4
    x = jax.random.normal(key, (B, L), dtype=jnp.float32)
    model = STFT(n_fft, hop)
    spec = jax.block_until_ready(model(x))
    T, N = 1 + L // hop, n_fft // 2 + 1
    assert spec.shape == (B, N, T, 2), spec.shape
    ref = jax_reference(x, n_fft, hop, model.window)
    assert jnp.allclose(spec, ref, atol=1e-3, rtol=1e-3)

    # 2) multi-tile resident path (several M tiles, n_fft already a lane mult.)
    B2, L2, n_fft2, hop2 = 2, 2048, 128, 32
    x2 = jax.random.normal(jax.random.PRNGKey(0), (B2, L2), dtype=jnp.float32)
    model2 = STFT(n_fft2, hop2)
    spec2 = jax.block_until_ready(
        stft_pallas(x2, model2.basis, n_fft=n_fft2, hop_length=hop2, tm=64))
    ref2 = jax_reference(x2, n_fft2, hop2, model2.window)
    assert spec2.shape == ref2.shape, (spec2.shape, ref2.shape)
    assert jnp.allclose(spec2, ref2, atol=2e-3, rtol=2e-3)
    spec2b = jax.block_until_ready(model2(x2))               # jitted default path
    assert jnp.allclose(spec2b, ref2, atol=2e-3, rtol=2e-3)

    # 3) forced tiled path (freq + row + K grid axes, f32 accumulator)
    B3, L3, n_fft3, hop3 = 2, 1024, 256, 64
    x3 = jax.random.normal(jax.random.PRNGKey(0), (B3, L3), dtype=jnp.float32)
    basis3 = make_stft_basis(n_fft3)
    spec3 = jax.block_until_ready(
        stft_pallas(x3, basis3, n_fft=n_fft3, hop_length=hop3,
                    tm=32, tn=128, tk=128))
    ref3 = jax_reference(x3, n_fft3, hop3, hann_window(n_fft3))
    assert spec3.shape == ref3.shape, (spec3.shape, ref3.shape)
    assert jnp.allclose(spec3, ref3, atol=2e-3, rtol=2e-3)

    print("KERNEL_OK")
</pallas_src>

<mosaic_0001>
module attributes {stable_mosaic.version = 11 : i64} {
  func.func @_stft_resident_kernel(%arg0: i32, %arg1: memref<40x16xf32, #tpu.memory_space<vmem>>, %arg2: memref<16x128xf32, #tpu.memory_space<vmem>>, %arg3: memref<40x128xf32, #tpu.memory_space<vmem>>) attributes {dimension_semantics = [#tpu.dimension_semantics<parallel>], iteration_bounds = array<i64: 1>, scalar_prefetch = 0 : i64, scratch_operands = 0 : i64, tpu.core_type = #tpu.core_type<tc>, window_params = [{transform_indices = @transform_0, window_bounds = array<i64: 40, 16>}, {pipeline_mode = #tpu.pipeline_mode<synchronous>, transform_indices = @transform_1, window_bounds = array<i64: 16, 128>}, {transform_indices = @transform_2, window_bounds = array<i64: 40, 128>}]} {
    %c0 = arith.constant 0 : index
    %c0_0 = arith.constant 0 : index
    %0 = vector.load %arg1[%c0, %c0_0] : memref<40x16xf32, #tpu.memory_space<vmem>>, vector<40x16xf32>
    %c0_1 = arith.constant 0 : index
    %c0_2 = arith.constant 0 : index
    %1 = vector.load %arg2[%c0_1, %c0_2] : memref<16x128xf32, #tpu.memory_space<vmem>>, vector<16x128xf32>
    %cst = arith.constant dense<0.000000e+00> : vector<40x128xf32>
    %2 = tpu.matmul %0, %1, %cst {dimension_numbers = #tpu.dot_dimension_numbers<[1], [0], [0], [1], [0, 0, 1, 1], [], []>} : vector<40x16xf32>, vector<16x128xf32>, vector<40x128xf32> -> vector<40x128xf32>
    %c0_3 = arith.constant 0 : index
    %c0_4 = arith.constant 0 : index
    %3 = vector.load %arg3[%c0_3, %c0_4] : memref<40x128xf32, #tpu.memory_space<vmem>>, vector<40x128xf32>
    tpu.vector_store %arg3[%c0_3, %c0_4], %2 {strides = array<i32>} : memref<40x128xf32, #tpu.memory_space<vmem>>, vector<40x128xf32>,
    return
  }
  func.func @transform_0(%arg0: i32) -> (i32, i32) {
    %c0_i32 = arith.constant 0 : i32
    %c0_i32_0 = arith.constant 0 : i32
    return %arg0, %c0_i32 : i32, i32
  }
  func.func @transform_1(%arg0: i32) -> (i32, i32) {
    %c0_i32 = arith.constant 0 : i32
    %c0_i32_0 = arith.constant 0 : i32
    %c0_i32_1 = arith.constant 0 : i32
    return %c0_i32, %c0_i32_0 : i32, i32
  }
  func.func @transform_2(%arg0: i32) -> (i32, i32) {
    %c0_i32 = arith.constant 0 : i32
    %c0_i32_0 = arith.constant 0 : i32
    return %arg0, %c0_i32 : i32, i32
  }
}

</mosaic_0001>

<llo_original>
// kernel: stft_pallas.1
$region0: #{stft_pallas.1}
  #allocation0 [shape = 'u32[]', space=smem, size = 0x4, offset = 0x4, fixed_abs, tag = 'smem constant byte address 0x4 - core index']
  #allocation1 [shape = 'u32[72,128]{1,0:T(1,128)}', space=vmem, size = 0x9000, scoped, tag = 'internal scratch']
  %s0 = inlined_call_operand.vmem [shape: f32[40,16], index: 0, kind: input, shape index: {}]
  %s1 = inlined_call_operand.vmem [shape: f32[16,128], index: 1, kind: input, shape index: {}]
  %s2 = inlined_call_operand.vmem [shape: f32[40,128], index: 2, kind: output, shape index: {}]
  %s3 = sld [smem:[#allocation0]]
  $region18: #{stft_pallas.1} parent=0
    _
  %s5 = ssub.s32 1, %s3
  %s6 = scalar_select 0, %s5, %s3
  // Predicated region
  $region2: #{stft_pallas.1} parent=0 // pred_check
    _
  $region3: #{stft_pallas.1} parent=0 // pred_check_branch
    %8 = sbr.rel (0) target = $region5
  $region4: #{stft_pallas.1} parent=0 // pred_region
    _
  $region5: #{stft_pallas.1} parent=0 // pred_fallthru
    _
  // Predicated region
  $region6: #{stft_pallas.1} parent=0 // pred_check
    _
  $region7: #{stft_pallas.1} parent=0 // pred_check_branch
    %10 = sbr.rel (0) target = $region9
  $region8: #{stft_pallas.1} parent=0 // pred_region
    _
  $region9: #{stft_pallas.1} parent=0 // pred_fallthru
    _
  %v11 = vld [vmem:[%s0] sm:$0xff]
  %v12 = vld [vmem:[%s0 + $0x8] sm:$0xff]
  %v13 = vld [vmem:[%s0 + $0x10] sm:$0xff]
  %v14 = vld [vmem:[%s0 + $0x18] sm:$0xff]
  %v15 = vld [vmem:[%s0 + $0x20] sm:$0xff]
  %v16 = vld [vmem:[%s1] sm:$0xff]
  %v17 = vld [vmem:[%s1 + $0x8] sm:$0xff]
  %vm18 = vcmask 130048
  %v20 = vsel %vm18, %v11, 0
  %v23 = vsel %vm18, %v12, 0
  %v26 = vsel %vm18, %v13, 0
  %v29 = vsel %vm18, %v14, 0
  %v32 = vsel %vm18, %v15, 0
  %34 = vmatpush.msra.mxu0 0.0
  %35 = vmatpush.msra.mxu0 0.0
  %36 = vmatpush.msra.mxu0 0.0
  %37 = vmatpush.msra.mxu0 0.0
  %38 = vmatpush.msra.mxu0 0.0
  %39 = vmatpush.msra.mxu0 0.0
  %40 = vmatpush.msra.mxu0 0.0
  %41 = vmatpush.msra.mxu0 0.0
  %42 = vmatpush.msra.mxu0 0.0
  %43 = vmatpush.msra.mxu0 0.0
  %44 = vmatpush.msra.mxu0 0.0
  %45 = vmatpush.msra.mxu0 0.0
  %46 = vmatpush.msra.mxu0 0.0
  %47 = vmatpush.msra.mxu0 0.0
  %48 = vmatpush.msra.mxu0 %v17
  %49 = vmatpush.msra.mxu0 %v16
  %50 = vmatmul.f32.gmra.mxu0 %v20
  %v51 = vpop.f32.mrf.mxu0
  %v52 = vadd.f32 0.0, %v51
  %53 = vmatmul.f32.gmra.mxu0 %v23
  %v54 = vpop.f32.mrf.mxu0
  %v55 = vadd.f32 0.0, %v54
  %56 = vmatmul.f32.gmra.mxu0 %v26
  %v57 = vpop.f32.mrf.mxu0
  %v58 = vadd.f32 0.0, %v57
  %59 = vmatmul.f32.gmra.mxu0 %v29
  %v60 = vpop.f32.mrf.mxu0
  %v61 = vadd.f32 0.0, %v60
  %62 = vmatmul.f32.gmra.mxu0 %v32
  %v63 = vpop.f32.mrf.mxu0
  %v64 = vadd.f32 0.0, %v63
  %65 = vdwg.mxu0
  %66 = vst [vmem:[%s2] sm:$0xff] %v52
  %67 = vst [vmem:[%s2 + $0x8] sm:$0xff] %v55
  %68 = vst [vmem:[%s2 + $0x10] sm:$0xff] %v58
  %69 = vst [vmem:[%s2 + $0x18] sm:$0xff] %v61
  %70 = vst [vmem:[%s2 + $0x20] sm:$0xff] %v64
  // Predicated region
  $region10: #{stft_pallas.1} parent=0 // pred_check
    _
  $region11: #{stft_pallas.1} parent=0 // pred_check_branch
    %72 = sbr.rel (0) target = $region13
  $region12: #{stft_pallas.1} parent=0 // pred_region
    _
  $region13: #{stft_pallas.1} parent=0 // pred_fallthru
    _
  // Predicated region
  $region14: #{stft_pallas.1} parent=0 // pred_check
    _
  $region15: #{stft_pallas.1} parent=0 // pred_check_branch
    %74 = sbr.rel (0) target = $region17
  $region16: #{stft_pallas.1} parent=0 // pred_region
    _
  $region17: #{stft_pallas.1} parent=0 // pred_fallthru
    _

</llo_original>
